<compile_context>
chip_gen: v7x
topology: tpu7x:2x2x1
jax: 0.10.0
libtpu: 0.0.40
codegen_flags: <defaults>
</compile_context>

<pallas_src>
import jax
import jax.numpy as jnp
from jax import lax
from jax.experimental import pallas as pl
from jax.experimental.pallas import tpu as pltpu


def _round_up(x, m):
    return ((x + m - 1) // m) * m


def _cdiv(a, b):
    return (a + b - 1) // b


# ---------------------------------------------------------------------------
# Fused path: z^T resident in VMEM, in-kernel gather via one-hot matmul.
# ---------------------------------------------------------------------------
def _distmult_fused_kernel(src_ref, dst_ref, zt_ref, rel_ref, o_ref):
    # src/dst: (1, tile_e) int32 edge endpoints for this tile (edges on lanes).
    # zt_ref:  (D, N_pad) node embeddings, transposed, VMEM-resident.
    # rel_ref: (D, 1) relation column.
    # o_ref:   (1, tile_e) lane-dense scores.
    n_pad = zt_ref.shape[1]
    tile_e = src_ref.shape[1]

    zt = zt_ref[...].astype(jnp.float32)                  # (D, N_pad)
    rel = rel_ref[...].astype(jnp.float32)                # (D, 1)
    zr = zt * rel                                         # fold rel into head side

    iota = lax.broadcasted_iota(jnp.int32, (n_pad, tile_e), 0)
    one = jnp.float32(1.0)
    zero = jnp.float32(0.0)
    oh_src = jnp.where(iota == src_ref[...], one, zero)   # (N_pad, tile_e)
    oh_dst = jnp.where(iota == dst_ref[...], one, zero)   # (N_pad, tile_e)

    # Gather-by-matmul on the MXU: (D, N_pad) @ (N_pad, tile_e) -> (D, tile_e)
    head = jnp.dot(zr, oh_src, preferred_element_type=jnp.float32)
    tail = jnp.dot(zt, oh_dst, preferred_element_type=jnp.float32)

    # Reduce over the embedding dim (sublanes) -> lane-dense (1, tile_e) row.
    o_ref[...] = jnp.sum(head * tail, axis=0, keepdims=True).astype(o_ref.dtype)


def _distmult_fused(z, src, dst, rel, E, N, D, dtype):
    n_pad = _round_up(N, 128)
    # Bound per-tile f32 intermediates (2 one-hot (N_pad, tile) + a few
    # (D, tile)) to ~4 MiB and keep >=2-4 grid steps when E is large enough so
    # DMA/compute overlap and v7x's two TensorCores both get work.
    bytes_per_edge = (2 * n_pad + 4 * D) * 4
    rows_budget = max(128, ((4 * 1024 * 1024) // bytes_per_edge) // 128 * 128)
    steps_cap = max(128, _round_up(_cdiv(E, 4), 128))
    tile_e = min(rows_budget, steps_cap)
    e_pad = _round_up(E, tile_e)
    num_tiles = e_pad // tile_e

    z_t = jnp.zeros((D, n_pad), dtype).at[:, :N].set(z.T)  # (D, N_pad)
    rel_col = rel.reshape(D, 1)

    pad = e_pad - E
    if pad:
        zero = jnp.zeros((pad,), jnp.int32)
        src = jnp.concatenate([src, zero])
        dst = jnp.concatenate([dst, zero])
    src2 = src.reshape(num_tiles, tile_e)
    dst2 = dst.reshape(num_tiles, tile_e)

    out = pl.pallas_call(
        _distmult_fused_kernel,
        out_shape=jax.ShapeDtypeStruct((num_tiles, tile_e), dtype),
        grid_spec=pltpu.PrefetchScalarGridSpec(
            num_scalar_prefetch=0,
            grid=(num_tiles,),
            in_specs=[
                pl.BlockSpec((1, tile_e), lambda i: (i, 0)),   # src indices
                pl.BlockSpec((1, tile_e), lambda i: (i, 0)),   # dst indices
                pl.BlockSpec((D, n_pad), lambda i: (0, 0)),    # z^T (resident)
                pl.BlockSpec((D, 1), lambda i: (0, 0)),        # rel (resident)
            ],
            out_specs=pl.BlockSpec((1, tile_e), lambda i: (i, 0)),
        ),
        compiler_params=pltpu.CompilerParams(
            dimension_semantics=("parallel",),
            vmem_limit_bytes=32 * 1024 * 1024,
        ),
    )(src2, dst2, z_t, rel_col)
    return out.reshape(-1)[:E]


# ---------------------------------------------------------------------------
# Streaming fallback: wrapper gather (fusible into the pallas inputs) + fused
# multiply/reduce with lane-dense output.
# ---------------------------------------------------------------------------
def _distmult_stream_kernel(head_ref, tail_ref, rel_ref, o_ref):
    h = head_ref[...].astype(jnp.float32)                  # (tile_e, D)
    t = tail_ref[...].astype(jnp.float32)                  # (tile_e, D)
    r = rel_ref[...].astype(jnp.float32)                   # (1, D)
    p = h * t
    # rel @ p^T on the MXU: folds the rel-multiply and the D-reduction and
    # directly produces a lane-dense (1, tile_e) row (no masked 1-lane stores).
    s = lax.dot_general(r, p, (((1,), (1,)), ((), ())),
                        preferred_element_type=jnp.float32)
    o_ref[...] = s.astype(o_ref.dtype)


def _distmult_stream(z, src, dst, rel, E, D, dtype):
    itemsize = jnp.dtype(dtype).itemsize
    # ~4 MiB per streamed input block: 2 inputs x 2 pipeline buffers x 4 MiB
    # = 16 MiB of VMEM, safe on v5e/v6e/v7x; keep >=2-4 grid steps.
    rows_budget = max(128, ((4 * 1024 * 1024) // max(1, D * itemsize)) // 128 * 128)
    steps_cap = max(128, _round_up(_cdiv(E, 4), 128))
    tile_e = min(rows_budget, steps_cap)
    e_pad = _round_up(E, tile_e)
    num_tiles = e_pad // tile_e

    pad = e_pad - E
    if pad:
        zero = jnp.zeros((pad,), jnp.int32)
        src = jnp.concatenate([src, zero])
        dst = jnp.concatenate([dst, zero])

    head = jnp.take(z, src, axis=0)        # (E_pad, D)
    tail = jnp.take(z, dst, axis=0)        # (E_pad, D)
    rel_row = rel.reshape(1, D)

    out = pl.pallas_call(
        _distmult_stream_kernel,
        out_shape=jax.ShapeDtypeStruct((num_tiles, tile_e), dtype),
        grid_spec=pltpu.PrefetchScalarGridSpec(
            num_scalar_prefetch=0,
            grid=(num_tiles,),
            in_specs=[
                pl.BlockSpec((tile_e, D), lambda i: (i, 0)),   # head tile
                pl.BlockSpec((tile_e, D), lambda i: (i, 0)),   # tail tile
                pl.BlockSpec((1, D), lambda i: (0, 0)),        # rel (resident)
            ],
            out_specs=pl.BlockSpec((1, tile_e), lambda i: (i, 0)),
        ),
        compiler_params=pltpu.CompilerParams(
            dimension_semantics=("parallel",),
            # Let XLA fuse the gather producers into the pallas inputs instead
            # of materializing head/tail (2 x E_pad x D) in HBM.
            allow_input_fusion=[True, True, False],
            vmem_limit_bytes=32 * 1024 * 1024,
        ),
    )(head, tail, rel_row)
    return out.reshape(-1)[:E]


# ---------------------------------------------------------------------------
# Public wrapper.
# ---------------------------------------------------------------------------
def distmult_decoder(z, edge_label_index, rel_weight, *, fused=None):
    """DistMult scores: (z[src] * rel_weight[0] * z[dst]).sum(-1) -> (E,)."""
    z = jnp.asarray(z)
    N, D = z.shape
    dtype = z.dtype

    rel_w = jnp.asarray(rel_weight)
    # PyTorch indexes rel_emb.weight[0]; accept a (num_rel, D) table or a (D,).
    rel = (rel_w[0] if rel_w.ndim == 2 else rel_w.reshape(-1)).astype(dtype)

    src = jnp.asarray(edge_label_index[0]).astype(jnp.int32)
    dst = jnp.asarray(edge_label_index[1]).astype(jnp.int32)
    E = int(src.shape[0])

    if fused is None:
        # One-hot gather-by-matmul only wins while z fits comfortably in VMEM
        # and the extra MXU work per edge (~2*N_pad*D MAC) stays below the HBM
        # traffic it saves (~2*D*itemsize per edge).
        fused = (N <= 1024) and (N * D * jnp.dtype(dtype).itemsize <= 4 * 1024 * 1024)

    if fused:
        return _distmult_fused(z, src, dst, rel, E, N, D, dtype)
    return _distmult_stream(z, src, dst, rel, E, D, dtype)


if __name__ == "__main__":
    key = jax.random.PRNGKey(0)
    k_z, k_rel, k_src, k_dst = jax.random.split(key, 4)

    num_nodes = 16
    embedding_channels = 32
    num_edges = 8

    z = jax.random.normal(k_z, (num_nodes, embedding_channels), dtype=jnp.float32)
    # xavier_uniform init for the (1, D) relation embedding.
    bound = (6.0 / (1.0 + embedding_channels)) ** 0.5
    rel_weight = jax.random.uniform(
        k_rel, (1, embedding_channels), dtype=jnp.float32,
        minval=-bound, maxval=bound)
    edge_label_index = jnp.stack([
        jax.random.randint(k_src, (num_edges,), 0, num_nodes, dtype=jnp.int32),
        jax.random.randint(k_dst, (num_edges,), 0, num_nodes, dtype=jnp.int32),
    ])

    # Pure-JAX reference.
    ref = jnp.sum(z[edge_label_index[0]] * rel_weight[0] * z[edge_label_index[1]],
                  axis=-1)

    # Fused (VMEM-resident z, in-kernel gather) path — the default here.
    scores = jax.block_until_ready(distmult_decoder(z, edge_label_index, rel_weight))
    assert scores.shape == (num_edges,), (scores.shape, (num_edges,))
    assert scores.dtype == z.dtype, (scores.dtype, z.dtype)
    assert bool(jnp.allclose(scores, ref, atol=1e-5, rtol=1e-5)), (scores, ref)

    # Streaming fallback path (used when z / N are too large for residency).
    scores_s = jax.block_until_ready(
        distmult_decoder(z, edge_label_index, rel_weight, fused=False))
    assert scores_s.shape == (num_edges,), (scores_s.shape, (num_edges,))
    assert bool(jnp.allclose(scores_s, ref, atol=1e-5, rtol=1e-5)), (scores_s, ref)

    print("KERNEL_OK")
</pallas_src>

<mosaic_0001>
module attributes {stable_mosaic.version = 11 : i64} {
  func.func @_distmult_fused_kernel(%arg0: i32, %arg1: memref<1x128xi32, #tpu.memory_space<vmem>>, %arg2: memref<1x128xi32, #tpu.memory_space<vmem>>, %arg3: memref<32x128xf32, #tpu.memory_space<vmem>>, %arg4: memref<32x1xf32, #tpu.memory_space<vmem>>, %arg5: memref<1x128xf32, #tpu.memory_space<vmem>>) attributes {dimension_semantics = [#tpu.dimension_semantics<parallel>], iteration_bounds = array<i64: 1>, scalar_prefetch = 0 : i64, scratch_operands = 0 : i64, tpu.core_type = #tpu.core_type<tc>, window_params = [{transform_indices = @transform_0, window_bounds = array<i64: 1, 128>}, {transform_indices = @transform_1, window_bounds = array<i64: 1, 128>}, {pipeline_mode = #tpu.pipeline_mode<synchronous>, transform_indices = @transform_2, window_bounds = array<i64: 32, 128>}, {pipeline_mode = #tpu.pipeline_mode<synchronous>, transform_indices = @transform_3, window_bounds = array<i64: 32, 1>}, {transform_indices = @transform_4, window_bounds = array<i64: 1, 128>}]} {
    %c0 = arith.constant 0 : index
    %c0_0 = arith.constant 0 : index
    %0 = vector.load %arg3[%c0, %c0_0] : memref<32x128xf32, #tpu.memory_space<vmem>>, vector<32x128xf32>
    %c0_1 = arith.constant 0 : index
    %c0_2 = arith.constant 0 : index
    %1 = vector.load %arg4[%c0_1, %c0_2] : memref<32x1xf32, #tpu.memory_space<vmem>>, vector<32x1xf32>
    %2 = vector.broadcast %1 : vector<32x1xf32> to vector<32x128xf32>
    %3 = arith.mulf %0, %2 : vector<32x128xf32>
    %4 = tpu.iota {dimensions = array<i32: 0>} : vector<128x128xi32>
    %c0_3 = arith.constant 0 : index
    %c0_4 = arith.constant 0 : index
    %5 = vector.load %arg1[%c0_3, %c0_4] : memref<1x128xi32, #tpu.memory_space<vmem>>, vector<1x128xi32>
    %6 = vector.broadcast %5 : vector<1x128xi32> to vector<128x128xi32>
    %7 = arith.cmpi eq, %4, %6 : vector<128x128xi32>
    %cst = arith.constant 1.000000e+00 : f32
    %cst_5 = arith.constant 0.000000e+00 : f32
    %8 = vector.broadcast %cst : f32 to vector<128x128xf32>
    %9 = vector.broadcast %cst_5 : f32 to vector<128x128xf32>
    %10 = arith.select %7, %8, %9 : vector<128x128xi1>, vector<128x128xf32>
    %c0_6 = arith.constant 0 : index
    %c0_7 = arith.constant 0 : index
    %11 = vector.load %arg2[%c0_6, %c0_7] : memref<1x128xi32, #tpu.memory_space<vmem>>, vector<1x128xi32>
    %12 = vector.broadcast %11 : vector<1x128xi32> to vector<128x128xi32>
    %13 = arith.cmpi eq, %4, %12 : vector<128x128xi32>
    %cst_8 = arith.constant 1.000000e+00 : f32
    %cst_9 = arith.constant 0.000000e+00 : f32
    %14 = vector.broadcast %cst_8 : f32 to vector<128x128xf32>
    %15 = vector.broadcast %cst_9 : f32 to vector<128x128xf32>
    %16 = arith.select %13, %14, %15 : vector<128x128xi1>, vector<128x128xf32>
    %cst_10 = arith.constant dense<0.000000e+00> : vector<32x128xf32>
    %17 = tpu.matmul %3, %10, %cst_10 {dimension_numbers = #tpu.dot_dimension_numbers<[1], [0], [0], [1], [0, 0, 1, 1], [], []>} : vector<32x128xf32>, vector<128x128xf32>, vector<32x128xf32> -> vector<32x128xf32>
    %cst_11 = arith.constant dense<0.000000e+00> : vector<32x128xf32>
    %18 = tpu.matmul %0, %16, %cst_11 {dimension_numbers = #tpu.dot_dimension_numbers<[1], [0], [0], [1], [0, 0, 1, 1], [], []>} : vector<32x128xf32>, vector<128x128xf32>, vector<32x128xf32> -> vector<32x128xf32>
    %19 = arith.mulf %17, %18 : vector<32x128xf32>
    %cst_12 = arith.constant dense<0.000000e+00> : vector<128xf32>
    %20 = vector.multi_reduction <add>, %19, %cst_12 [0] : vector<32x128xf32> to vector<128xf32>
    %21 = vector.shape_cast %20 : vector<128xf32> to vector<1x128xf32>
    %c0_13 = arith.constant 0 : index
    %c0_14 = arith.constant 0 : index
    %22 = vector.load %arg5[%c0_13, %c0_14] : memref<1x128xf32, #tpu.memory_space<vmem>>, vector<1x128xf32>
    tpu.vector_store %arg5[%c0_13, %c0_14], %21 {strides = array<i32>} : memref<1x128xf32, #tpu.memory_space<vmem>>, vector<1x128xf32>,
    return
  }
  func.func @transform_0(%arg0: i32) -> (i32, i32) {
    %c0_i32 = arith.constant 0 : i32
    %c0_i32_0 = arith.constant 0 : i32
    return %arg0, %c0_i32 : i32, i32
  }
  func.func @transform_1(%arg0: i32) -> (i32, i32) {
    %c0_i32 = arith.constant 0 : i32
    %c0_i32_0 = arith.constant 0 : i32
    return %arg0, %c0_i32 : i32, i32
  }
  func.func @transform_2(%arg0: i32) -> (i32, i32) {
    %c0_i32 = arith.constant 0 : i32
    %c0_i32_0 = arith.constant 0 : i32
    %c0_i32_1 = arith.constant 0 : i32
    return %c0_i32, %c0_i32_0 : i32, i32
  }
  func.func @transform_3(%arg0: i32) -> (i32, i32) {
    %c0_i32 = arith.constant 0 : i32
    %c0_i32_0 = arith.constant 0 : i32
    %c0_i32_1 = arith.constant 0 : i32
    return %c0_i32, %c0_i32_0 : i32, i32
  }
  func.func @transform_4(%arg0: i32) -> (i32, i32) {
    %c0_i32 = arith.constant 0 : i32
    %c0_i32_0 = arith.constant 0 : i32
    return %arg0, %c0_i32 : i32, i32
  }
}

</mosaic_0001>

<llo_original>
// kernel: tpu_custom_call.1
$region0: #{tpu_custom_call.1}
  #allocation0 [shape = 'u32[]', space=smem, size = 0x4, offset = 0x4, fixed_abs, tag = 'smem constant byte address 0x4 - core index']
  #allocation1 [shape = 'u32[144,128]{1,0:T(1,128)}', space=vmem, size = 0x12000, scoped, tag = 'internal scratch']
  %s0 = inlined_call_operand.vmem [shape: s32[1,128], index: 0, kind: input, shape index: {}]
  %s1 = inlined_call_operand.vmem [shape: s32[1,128], index: 1, kind: input, shape index: {}]
  %s2 = inlined_call_operand.vmem [shape: f32[32,128], index: 2, kind: input, shape index: {}]
  %s3 = inlined_call_operand.vmem [shape: f32[32,1], index: 3, kind: input, shape index: {}]
  %s4 = inlined_call_operand.hbm [shape: f32[1,128], index: 4, kind: output, shape index: {}]
  %s5 = sld [smem:[#allocation0]]
  $region26: #{tpu_custom_call.1} parent=0
    _
  %s7 = ssub.s32 1, %s5
  %s8 = scalar_select 0, %s7, %s5
  $region1: #{tpu_custom_call.1} parent=0
    #allocation2 [shape = 'u8[512]{0}', space=vmem, size = 0x400, scoped, tag = 'output window, operand 0, single buffered']
    #allocation3 [shape = 's32[1]{0}', space=sflag, size = 0x4, scoped, tag = 'scoped memory for tpu_custom_call.1']
    %9 = vsyncpa [#allocation3], 0
    // Predicated region
    $region2: #{tpu_custom_call.1} parent=1 // pred_check
      _
    $region3: #{tpu_custom_call.1} parent=1 // pred_check_branch
      %11 = sbr.rel (0) target = $region5
    $region4: #{tpu_custom_call.1} parent=1 // pred_region
      _
    $region5: #{tpu_custom_call.1} parent=1 // pred_fallthru
      _
    // Predicated region
    $region6: #{tpu_custom_call.1} parent=1 // pred_check
      _
    $region7: #{tpu_custom_call.1} parent=1 // pred_check_branch
      %13 = sbr.rel (0) target = $region9
    $region8: #{tpu_custom_call.1} parent=1 // pred_region
      _
    $region9: #{tpu_custom_call.1} parent=1 // pred_fallthru
      _
    // Predicated region
    $region10: #{tpu_custom_call.1} parent=1 // pred_check
      _
    $region11: #{tpu_custom_call.1} parent=1 // pred_check_branch
      %15 = sbr.rel (0) target = $region13
    $region12: #{tpu_custom_call.1} parent=1 // pred_region
      _
    $region13: #{tpu_custom_call.1} parent=1 // pred_fallthru
      _
    // Predicated region
    $region14: #{tpu_custom_call.1} parent=1 // pred_check
      _
    $region15: #{tpu_custom_call.1} parent=1 // pred_check_branch
      %17 = sbr.rel (0) target = $region17
    $region16: #{tpu_custom_call.1} parent=1 // pred_region
      _
    $region17: #{tpu_custom_call.1} parent=1 // pred_fallthru
      _
    %v18 = vld [vmem:[%s2] sm:$0xff]
    %v19 = vld [vmem:[%s2 + $0x8] sm:$0xff]
    %v20 = vld [vmem:[%s2 + $0x10] sm:$0xff]
    %v21 = vld [vmem:[%s2 + $0x18] sm:$0xff]
    %v22 = vld [vmem:[%s3] sm:$0xff]
    %v23 = vld [vmem:[%s3 + $0x8] sm:$0xff]
    %v24 = vld [vmem:[%s3 + $0x10] sm:$0xff]
    %v25 = vld [vmem:[%s3 + $0x18] sm:$0xff]
    %27 = vset.pattern.permute.xlu0 0
    %28 = vperm.xlu0 %27, %v22
    %v29 = vpop.permute.xlu0 %28
    %32 = vset.pattern.permute.xlu0 0
    %33 = vperm.xlu0 %32, %v23
    %v34 = vpop.permute.xlu0 %33
    %37 = vset.pattern.permute.xlu0 0
    %38 = vperm.xlu0 %37, %v24
    %v39 = vpop.permute.xlu0 %38
    %42 = vset.pattern.permute.xlu0 0
    %43 = vperm.xlu0 %42, %v25
    %v44 = vpop.permute.xlu0 %43
    %v46 = vmul.f32 %v18, %v29
    %v47 = vmul.f32 %v19, %v34
    %v48 = vmul.f32 %v20, %v39
    %v49 = vmul.f32 %v21, %v44
    %v50 = vlaneseq
    %v51 = vshrl.u32 %v50, 7
    %v52 = vadd.s32 %v51, 8
    %v53 = vadd.s32 %v51, 16
    %v54 = vadd.s32 %v51, 24
    %v55 = vadd.s32 %v51, 32
    %v56 = vadd.s32 %v51, 40
    %v57 = vadd.s32 %v51, 48
    %v58 = vadd.s32 %v51, 56
    %v59 = vadd.s32 %v51, 64
    %v60 = vadd.s32 %v51, 72
    %v61 = vadd.s32 %v51, 80
    %v62 = vadd.s32 %v51, 88
    %v63 = vadd.s32 %v51, 96
    %v64 = vadd.s32 %v51, 104
    %v65 = vadd.s32 %v51, 112
    %v66 = vadd.s32 %v51, 120
    %v67 = vld [vmem:[%s0] sm:$0x1]
    %v68 = vlaneseq
    %v69 = vshrl.u32 %v68, 7
    %v70 = vsub.s32 0, %v69
    %v71 = vrot.slane %v67, %v70
    %vm72 = vcmp.eq.s32.totalorder %v51, %v71
    %vm73 = vcmp.eq.s32.totalorder %v52, %v71
    %vm74 = vcmp.eq.s32.totalorder %v53, %v71
    %vm75 = vcmp.eq.s32.totalorder %v54, %v71
    %vm76 = vcmp.eq.s32.totalorder %v55, %v71
    %vm77 = vcmp.eq.s32.totalorder %v56, %v71
    %vm78 = vcmp.eq.s32.totalorder %v57, %v71
    %vm79 = vcmp.eq.s32.totalorder %v58, %v71
    %vm80 = vcmp.eq.s32.totalorder %v59, %v71
    %vm81 = vcmp.eq.s32.totalorder %v60, %v71
    %vm82 = vcmp.eq.s32.totalorder %v61, %v71
    %vm83 = vcmp.eq.s32.totalorder %v62, %v71
    %vm84 = vcmp.eq.s32.totalorder %v63, %v71
    %vm85 = vcmp.eq.s32.totalorder %v64, %v71
    %vm86 = vcmp.eq.s32.totalorder %v65, %v71
    %vm87 = vcmp.eq.s32.totalorder %v66, %v71
    %v88 = vsel %vm72, 1.0, 0.0
    %v89 = vsel %vm73, 1.0, 0.0
    %v90 = vsel %vm74, 1.0, 0.0
    %v91 = vsel %vm75, 1.0, 0.0
    %v92 = vsel %vm76, 1.0, 0.0
    %v93 = vsel %vm77, 1.0, 0.0
    %v94 = vsel %vm78, 1.0, 0.0
    %v95 = vsel %vm79, 1.0, 0.0
    %v96 = vsel %vm80, 1.0, 0.0
    %v97 = vsel %vm81, 1.0, 0.0
    %v98 = vsel %vm82, 1.0, 0.0
    %v99 = vsel %vm83, 1.0, 0.0
    %v100 = vsel %vm84, 1.0, 0.0
    %v101 = vsel %vm85, 1.0, 0.0
    %v102 = vsel %vm86, 1.0, 0.0
    %v103 = vsel %vm87, 1.0, 0.0
    %v104 = vld [vmem:[%s1] sm:$0x1]
    %v105 = vlaneseq
    %v106 = vshrl.u32 %v105, 7
    %v107 = vsub.s32 0, %v106
    %v108 = vrot.slane %v104, %v107
    %vm109 = vcmp.eq.s32.totalorder %v51, %v108
    %vm110 = vcmp.eq.s32.totalorder %v52, %v108
    %vm111 = vcmp.eq.s32.totalorder %v53, %v108
    %vm112 = vcmp.eq.s32.totalorder %v54, %v108
    %vm113 = vcmp.eq.s32.totalorder %v55, %v108
    %vm114 = vcmp.eq.s32.totalorder %v56, %v108
    %vm115 = vcmp.eq.s32.totalorder %v57, %v108
    %vm116 = vcmp.eq.s32.totalorder %v58, %v108
    %vm117 = vcmp.eq.s32.totalorder %v59, %v108
    %vm118 = vcmp.eq.s32.totalorder %v60, %v108
    %vm119 = vcmp.eq.s32.totalorder %v61, %v108
    %vm120 = vcmp.eq.s32.totalorder %v62, %v108
    %vm121 = vcmp.eq.s32.totalorder %v63, %v108
    %vm122 = vcmp.eq.s32.totalorder %v64, %v108
    %vm123 = vcmp.eq.s32.totalorder %v65, %v108
    %vm124 = vcmp.eq.s32.totalorder %v66, %v108
    %v125 = vsel %vm109, 1.0, 0.0
    %v126 = vsel %vm110, 1.0, 0.0
    %v127 = vsel %vm111, 1.0, 0.0
    %v128 = vsel %vm112, 1.0, 0.0
    %v129 = vsel %vm113, 1.0, 0.0
    %v130 = vsel %vm114, 1.0, 0.0
    %v131 = vsel %vm115, 1.0, 0.0
    %v132 = vsel %vm116, 1.0, 0.0
    %v133 = vsel %vm117, 1.0, 0.0
    %v134 = vsel %vm118, 1.0, 0.0
    %v135 = vsel %vm119, 1.0, 0.0
    %v136 = vsel %vm120, 1.0, 0.0
    %v137 = vsel %vm121, 1.0, 0.0
    %v138 = vsel %vm122, 1.0, 0.0
    %v139 = vsel %vm123, 1.0, 0.0
    %v140 = vsel %vm124, 1.0, 0.0
    %141 = vmatprep.subr.mxu0 0.0
    %142 = vmatpush1.msra.mxu0 %v88
    %143 = vmatprep.subr.mxu0 0.0
    %144 = vmatpush1.msra.mxu0 %v89
    %145 = vmatprep.subr.mxu0 0.0
    %146 = vmatpush1.msra.mxu0 %v90
    %147 = vmatprep.subr.mxu0 0.0
    %148 = vmatpush1.msra.mxu0 %v91
    %149 = vmatprep.subr.mxu0 0.0
    %150 = vmatpush1.msra.mxu0 %v92
    %151 = vmatprep.subr.mxu0 0.0
    %152 = vmatpush1.msra.mxu0 %v93
    %153 = vmatprep.subr.mxu0 0.0
    %154 = vmatpush1.msra.mxu0 %v94
    %155 = vmatprep.subr.mxu0 0.0
    %156 = vmatpush1.msra.mxu0 %v95
    %157 = vmatprep.subr.mxu0 0.0
    %158 = vmatpush1.msra.mxu0 %v96
    %159 = vmatprep.subr.mxu0 0.0
    %160 = vmatpush1.msra.mxu0 %v97
    %161 = vmatprep.subr.mxu0 0.0
    %162 = vmatpush1.msra.mxu0 %v98
    %163 = vmatprep.subr.mxu0 0.0
    %164 = vmatpush1.msra.mxu0 %v99
    %165 = vmatprep.subr.mxu0 0.0
    %166 = vmatpush1.msra.mxu0 %v100
    %167 = vmatprep.subr.mxu0 0.0
    %168 = vmatpush1.msra.mxu0 %v101
    %169 = vmatprep.subr.mxu0 0.0
    %170 = vmatpush1.msra.mxu0 %v102
    %171 = vmatprep.subr.mxu0 0.0
    %172 = vmatpush1.msra.mxu0 %v103
    %173 = vmatprep.subr.mxu0 0.0
    %174 = vmatpush1.msra.mxu0 0.0
    %175 = vmatprep.subr.mxu0 0.0
    %176 = vmatpush1.msra.mxu0 0.0
    %177 = vmatprep.subr.mxu0 0.0
    %178 = vmatpush1.msra.mxu0 0.0
    %179 = vmatprep.subr.mxu0 0.0
    %180 = vmatpush1.msra.mxu0 0.0
    %181 = vmatprep.subr.mxu0 0.0
    %182 = vmatpush1.msra.mxu0 0.0
    %183 = vmatprep.subr.mxu0 0.0
    %184 = vmatpush1.msra.mxu0 0.0
    %185 = vmatprep.subr.mxu0 0.0
    %186 = vmatpush1.msra.mxu0 0.0
    %187 = vmatprep.subr.mxu0 0.0
    %188 = vmatpush1.msra.mxu0 0.0
    %189 = vmatprep.subr.mxu0 0.0
    %190 = vmatpush1.msra.mxu0 0.0
    %191 = vmatprep.subr.mxu0 0.0
    %192 = vmatpush1.msra.mxu0 0.0
    %193 = vmatprep.subr.mxu0 0.0
    %194 = vmatpush1.msra.mxu0 0.0
    %195 = vmatprep.subr.mxu0 0.0
    %196 = vmatpush1.msra.mxu0 0.0
    %197 = vmatprep.subr.mxu0 0.0
    %198 = vmatpush1.msra.mxu0 0.0
    %199 = vmatprep.subr.mxu0 0.0
    %200 = vmatpush1.msra.mxu0 0.0
    %201 = vmatprep.subr.mxu0 0.0
    %202 = vmatpush1.msra.mxu0 0.0
    %203 = vmatprep.subr.mxu0 0.0
    %204 = vmatpush1.msra.mxu0 0.0
    %205 = vmatprep.mubr.f32.mxu0 0.0
    %206 = vmatmul.mubr.f32.gmra.mrb[0].mxu0 %v46
    %v207 = vpop.f32.mrb[0].mxu0
    %v208 = vadd.f32 0.0, %v207
    %v209 = vpop.f32.mrb[0].mxu0
    %210 = vmatprep.mubr.f32.mxu0 0.0
    %211 = vmatmul.mubr.f32.gmra.mrb[0].mxu0 %v47
    %v212 = vpop.f32.mrb[0].mxu0
    %v213 = vadd.f32 0.0, %v212
    %v214 = vpop.f32.mrb[0].mxu0
    %215 = vmatprep.mubr.f32.mxu0 0.0
    %216 = vmatmul.mubr.f32.gmra.mrb[0].mxu0 %v48
    %v217 = vpop.f32.mrb[0].mxu0
    %v218 = vadd.f32 0.0, %v217
    %v219 = vpop.f32.mrb[0].mxu0
    %220 = vmatprep.mubr.f32.mxu0 0.0
    %221 = vmatmul.mubr.f32.gmra.mrb[0].mxu0 %v49
    %v222 = vpop.f32.mrb[0].mxu0
    %v223 = vadd.f32 0.0, %v222
    %v224 = vpop.f32.mrb[0].mxu0
    %225 = vdwg.mxu0
    %226 = vmatprep.subr.mxu0 0.0
    %227 = vmatpush1.msra.mxu0 %v125
    %228 = vmatprep.subr.mxu0 0.0
    %229 = vmatpush1.msra.mxu0 %v126
    %230 = vmatprep.subr.mxu0 0.0
    %231 = vmatpush1.msra.mxu0 %v127
    %232 = vmatprep.subr.mxu0 0.0
    %233 = vmatpush1.msra.mxu0 %v128
    %234 = vmatprep.subr.mxu0 0.0
    %235 = vmatpush1.msra.mxu0 %v129
    %236 = vmatprep.subr.mxu0 0.0
    %237 = vmatpush1.msra.mxu0 %v130
    %238 = vmatprep.subr.mxu0 0.0
    %239 = vmatpush1.msra.mxu0 %v131
    %240 = vmatprep.subr.mxu0 0.0
    %241 = vmatpush1.msra.mxu0 %v132
    %242 = vmatprep.subr.mxu0 0.0
    %243 = vmatpush1.msra.mxu0 %v133
    %244 = vmatprep.subr.mxu0 0.0
    %245 = vmatpush1.msra.mxu0 %v134
    %246 = vmatprep.subr.mxu0 0.0
    %247 = vmatpush1.msra.mxu0 %v135
    %248 = vmatprep.subr.mxu0 0.0
    %249 = vmatpush1.msra.mxu0 %v136
    %250 = vmatprep.subr.mxu0 0.0
    %251 = vmatpush1.msra.mxu0 %v137
    %252 = vmatprep.subr.mxu0 0.0
    %253 = vmatpush1.msra.mxu0 %v138
    %254 = vmatprep.subr.mxu0 0.0
    %255 = vmatpush1.msra.mxu0 %v139
    %256 = vmatprep.subr.mxu0 0.0
    %257 = vmatpush1.msra.mxu0 %v140
    %258 = vmatprep.subr.mxu0 0.0
    %259 = vmatpush1.msra.mxu0 0.0
    %260 = vmatprep.subr.mxu0 0.0
    %261 = vmatpush1.msra.mxu0 0.0
    %262 = vmatprep.subr.mxu0 0.0
    %263 = vmatpush1.msra.mxu0 0.0
    %264 = vmatprep.subr.mxu0 0.0
    %265 = vmatpush1.msra.mxu0 0.0
    %266 = vmatprep.subr.mxu0 0.0
    %267 = vmatpush1.msra.mxu0 0.0
    %268 = vmatprep.subr.mxu0 0.0
    %269 = vmatpush1.msra.mxu0 0.0
    %270 = vmatprep.subr.mxu0 0.0
    %271 = vmatpush1.msra.mxu0 0.0
    %272 = vmatprep.subr.mxu0 0.0
    %273 = vmatpush1.msra.mxu0 0.0
    %274 = vmatprep.subr.mxu0 0.0
    %275 = vmatpush1.msra.mxu0 0.0
    %276 = vmatprep.subr.mxu0 0.0
    %277 = vmatpush1.msra.mxu0 0.0
    %278 = vmatprep.subr.mxu0 0.0
    %279 = vmatpush1.msra.mxu0 0.0
    %280 = vmatprep.subr.mxu0 0.0
    %281 = vmatpush1.msra.mxu0 0.0
    %282 = vmatprep.subr.mxu0 0.0
    %283 = vmatpush1.msra.mxu0 0.0
    %284 = vmatprep.subr.mxu0 0.0
    %285 = vmatpush1.msra.mxu0 0.0
    %286 = vmatprep.subr.mxu0 0.0
    %287 = vmatpush1.msra.mxu0 0.0
    %288 = vmatprep.subr.mxu0 0.0
    %289 = vmatpush1.msra.mxu0 0.0
    %290 = vmatprep.mubr.f32.mxu0 0.0
    %291 = vmatmul.mubr.f32.gmra.mrb[0].mxu0 %v18
    %v292 = vpop.f32.mrb[0].mxu0
    %v293 = vadd.f32 0.0, %v292
    %v294 = vpop.f32.mrb[0].mxu0
    %295 = vmatprep.mubr.f32.mxu0 0.0
    %296 = vmatmul.mubr.f32.gmra.mrb[0].mxu0 %v19
    %v297 = vpop.f32.mrb[0].mxu0
    %v298 = vadd.f32 0.0, %v297
    %v299 = vpop.f32.mrb[0].mxu0
    %300 = vmatprep.mubr.f32.mxu0 0.0
    %301 = vmatmul.mubr.f32.gmra.mrb[0].mxu0 %v20
    %v302 = vpop.f32.mrb[0].mxu0
    %v303 = vadd.f32 0.0, %v302
    %v304 = vpop.f32.mrb[0].mxu0
    %305 = vmatprep.mubr.f32.mxu0 0.0
    %306 = vmatmul.mubr.f32.gmra.mrb[0].mxu0 %v21
    %v307 = vpop.f32.mrb[0].mxu0
    %v308 = vadd.f32 0.0, %v307
    %v309 = vpop.f32.mrb[0].mxu0
    %310 = vdwg.mxu0
    %v311 = vmul.f32 %v208, %v293
    %v312 = vmul.f32 %v213, %v298
    %v313 = vmul.f32 %v218, %v303
    %v314 = vmul.f32 %v223, %v308
    %v315 = vadd.f32 %v311, %v312
    %v316 = vadd.f32 %v315, %v313
    %v317 = vadd.f32 %v316, %v314
    %v318 = vrot.slane %v317, 4
    %v319 = vadd.f32 %v317, %v318
    %v320 = vrot.slane %v319, 2
    %v321 = vadd.f32 %v319, %v320
    %v322 = vrot.slane %v321, 1
    %v323 = vadd.f32 %v321, %v322
    %324 = vst [vmem:[#allocation2] sm:$0x1] %v323
    // Predicated region
    $region18: #{tpu_custom_call.1} parent=1 // pred_check
      _
    $region19: #{tpu_custom_call.1} parent=1 // pred_check_branch
      %326 = sbr.rel (0) target = $region21
    $region20: #{tpu_custom_call.1} parent=1 // pred_region
      %s328 = ssub.s32 16, 16
      %329 = vsyncadd [#allocation3], %s328
      %s331 = sshll.u32 [#allocation2], 4
      %s332 = int_to_ptr.vmem [resolvable:$true] %s331
      %334 = dma.vmem_to_hbm [thread:$0]  %s332, 16, %s4, [#allocation3]
    $region21: #{tpu_custom_call.1} parent=1 // pred_fallthru
      _
    // Predicated region
    $region22: #{tpu_custom_call.1} parent=1 // pred_check
      _
    $region23: #{tpu_custom_call.1} parent=1 // pred_check_branch
      %336 = sbr.rel (0) target = $region25
    $region24: #{tpu_custom_call.1} parent=1 // pred_region
      %337 = dma.done [#allocation3], 16
    $region25: #{tpu_custom_call.1} parent=1 // pred_fallthru
      _
    %338 = vsyncpa [#allocation3], 1

</llo_original>
